<compile_context>
chip_gen: v7x
topology: tpu7x:2x2x1
jax: 0.10.0
libtpu: 0.0.40
codegen_flags: <defaults>
</compile_context>

<pallas_src>
import math

import jax
import jax.numpy as jnp
from jax.experimental import pallas as pl
from jax.experimental.pallas import tpu as pltpu

LABEL_SMOOTHING = 0.1   # nn.CrossEntropyLoss(label_smoothing=0.1)

# Weights from MultiTaskLossFunction._combine_losses (no modality_weighter).
W_DIFFUSION = 1.0
W_ELEMENT = 1.0
W_GEOMETRIC = 0.5
W_PROPS = 0.2
W_ALIGNMENT = 0.3
W_DIVERSITY = 0.1

_MIB = 1024 * 1024


def _vmem_capacity_bytes() -> int:
    """Physical per-core VMEM (128 MiB v5e/v6e, 64 MiB v7x) with safe fallback."""
    try:
        info = pltpu.get_tpu_info()
        cap = int(getattr(info, "vmem_capacity_bytes", 0) or 0)
        if cap > 0:
            return cap
    except Exception:
        pass
    return 64 * _MIB   # conservative (v7x-sized) default


def _plan_tiling(n_tokens, vocab, itemsize, vmem_capacity,
                 block_tokens=None, num_shards=None):
    """Pick (block_tokens, num_shards, tiles_per_shard, n_padded)."""
    # sublane multiple required by the logits dtype's native packing
    sub = {4: 8, 2: 16, 1: 32}.get(int(itemsize), 8)
    n_ceil = -(-n_tokens // sub) * sub

    if block_tokens is None:
        # generation-aware tile target: ~VMEM/10 per (double-buffered) tile
        target = max(vmem_capacity // 10, 256 * 1024)
        rows = (target // max(1, itemsize * vocab)) // sub * sub
        rows = int(min(max(rows, sub), 4096, n_ceil))
        # prefer an exact divisor of n_tokens (no pad copy) when one is close
        best = None
        d = rows
        while d >= sub:
            if n_tokens % d == 0:
                best = d
                break
            d -= sub
        if best is not None and best * 2 >= rows:
            rows = best
        block_tokens = rows
    else:
        block_tokens = max(sub, -(-int(block_tokens) // sub) * sub)
        block_tokens = min(block_tokens, n_ceil)

    total_tiles = -(-n_tokens // block_tokens)
    if num_shards is None:
        # size-2 leading "parallel" axis (v7x has 2 TensorCores per chip);
        # used when it is free (even tile count) or when padding happens anyway.
        needs_pad = (n_tokens % block_tokens) != 0
        num_shards = 2 if (total_tiles >= 2
                           and (total_tiles % 2 == 0 or needs_pad)) else 1
    num_shards = max(1, min(int(num_shards), total_tiles))

    tiles_per_shard = -(-total_tiles // num_shards)
    n_padded = num_shards * tiles_per_shard * block_tokens
    return block_tokens, num_shards, tiles_per_shard, n_padded


def _make_stream_kernel(block_tokens, vocab, eps):
    """Streaming pass over logits tiles: accumulate CE + softmax partials."""
    groups = block_tokens // 8
    w_hit = (1.0 - eps) + eps / float(vocab)   # weight of the target class
    w_miss = eps / float(vocab)                # weight of every other class

    def kernel(logits_ref, tgt_ref, lse_ref, wsum_ref, prob_ref):
        t = pl.program_id(1)

        @pl.when(t == 0)
        def _init():
            lse_ref[...] = jnp.zeros_like(lse_ref)
            wsum_ref[...] = jnp.zeros_like(wsum_ref)
            prob_ref[...] = jnp.zeros_like(prob_ref)

        logits = logits_ref[...].astype(jnp.float32)          # [TN, V]
        tgt = tgt_ref[...]                                     # [TN, 1] int32

        m = jnp.max(logits, axis=-1, keepdims=True)            # [TN, 1]
        shifted = logits - m
        e = jnp.exp(shifted)
        sum_e = jnp.sum(e, axis=-1, keepdims=True)              # [TN, 1]
        lse = jnp.log(sum_e)                                     # [TN, 1]

        # exact softmax probabilities (feed the diversity entropy term)
        probs = e * (1.0 / sum_e)                                # [TN, V]

        # label-smoothed CE:  tok_loss_i = lse_i - sum_j w_ij * shifted_ij
        # with w_ij = (1-eps)*onehot_ij + eps/V  -> accumulated elementwise.
        iota_v = jax.lax.broadcasted_iota(jnp.int32, (1, vocab), 1)
        w = jnp.where(iota_v == tgt, w_hit, w_miss)              # [TN, V]
        contrib = w * shifted                                     # [TN, V]

        # pure-VPU vector accumulations; the final reduces happen once in the
        # epilogue kernel.
        lse_ref[...] = lse_ref[...] + jnp.sum(
            lse.reshape(groups, 8, 1), axis=0)
        wsum_ref[...] = wsum_ref[...] + jnp.sum(
            contrib.reshape(groups, 8, vocab), axis=0)
        prob_ref[...] = prob_ref[...] + jnp.sum(
            probs.reshape(groups, 8, vocab), axis=0)

    return kernel


def _make_epilogue_kernel(n_tokens, n_pad, vocab):
    """One-shot finalize: small losses + cross-shard combine -> total scalar."""
    inv_n = 1.0 / float(n_tokens)
    log_v = math.log(float(vocab))

    def kernel(lse_ref, wsum_ref, prob_ref, np_ref, nt_ref, gp_ref, gt_ref,
               px_ref, pt_ref, vis_ref, str_ref, out_ref):
        # element CE from streamed partials; padded (all-zero) logits rows each
        # contribute exactly log(V) -> subtract analytically.
        ce_sum = (jnp.sum(lse_ref[...]) - jnp.sum(wsum_ref[...])
                  - jnp.float32(n_pad * log_v))
        element_loss = ce_sum * inv_n

        # diversity from streamed softmax-prob partials; padded rows contribute
        # a uniform 1/V per class -> subtract analytically.
        p_sub = jnp.sum(prob_ref[...], axis=0)                   # [8, V]
        prob_lane = jnp.sum(p_sub, axis=0, keepdims=True)        # [1, V]
        prob_lane = prob_lane - jnp.float32(n_pad / vocab)
        batch_dist = prob_lane * inv_n
        entropy = -jnp.sum(batch_dist * jnp.log(batch_dist + 1e-8))
        diversity_loss = jnp.float32(log_v) - entropy

        nd = np_ref[...].astype(jnp.float32) - nt_ref[...].astype(jnp.float32)
        diffusion_loss = jnp.mean(nd * nd)

        gd = gp_ref[...].astype(jnp.float32) - gt_ref[...].astype(jnp.float32)
        geometric_loss = jnp.mean(gd * gd)

        # BCEWithLogits: max(x,0) - x*y + log(1 + exp(-|x|))
        x = px_ref[...].astype(jnp.float32)
        y = pt_ref[...].astype(jnp.float32)
        props_loss = jnp.mean(jnp.maximum(x, 0.0) - x * y
                              + jnp.log(1.0 + jnp.exp(-jnp.abs(x))))

        # cross-modal alignment: -mean cosine similarity of pooled features
        vp = jnp.mean(vis_ref[...].astype(jnp.float32), axis=1)   # [B, D]
        sp = jnp.mean(str_ref[...].astype(jnp.float32), axis=1)   # [B, D]
        vn = vp * jax.lax.rsqrt(
            jnp.maximum(jnp.sum(vp * vp, axis=-1, keepdims=True), 1e-24))
        sn = sp * jax.lax.rsqrt(
            jnp.maximum(jnp.sum(sp * sp, axis=-1, keepdims=True), 1e-24))
        alignment_loss = -jnp.mean(jnp.sum(vn * sn, axis=-1))

        out_ref[0, 0] = (W_DIFFUSION * diffusion_loss
                         + W_ELEMENT * element_loss
                         + W_GEOMETRIC * geometric_loss
                         + W_PROPS * props_loss
                         + W_ALIGNMENT * alignment_loss
                         + W_DIVERSITY * diversity_loss)

    return kernel


def multitask_loss(element_logits, element_targets,
                   noise_prediction, noise_target,
                   geometric_predictions, geometric_targets,
                   props_logits, props_targets,
                   visual_features, structural_features,
                   *, label_smoothing=LABEL_SMOOTHING,
                   block_tokens=None, num_shards=None):
    B, S, V = element_logits.shape
    n_tokens = B * S

    vmem_cap = _vmem_capacity_bytes()
    vmem_limit = max(32 * _MIB, vmem_cap - 16 * _MIB)   # leave Mosaic headroom

    itemsize = jnp.dtype(element_logits.dtype).itemsize
    block_tokens, num_shards, tiles_per_shard, n_padded = _plan_tiling(
        n_tokens, V, itemsize, vmem_cap, block_tokens, num_shards)
    n_pad = n_padded - n_tokens

    # Stream logits in their native dtype (bf16 stays bf16 on the wire).
    logits2d = element_logits.reshape(n_tokens, V)
    targets2d = element_targets.reshape(n_tokens, 1).astype(jnp.int32)
    if n_pad:
        logits2d = jnp.pad(logits2d, ((0, n_pad), (0, 0)))
        targets2d = jnp.pad(targets2d, ((0, n_pad), (0, 0)))

    stream_kernel = _make_stream_kernel(block_tokens, V, float(label_smoothing))

    lse_p, wsum_p, prob_p = pl.pallas_call(
        stream_kernel,
        out_shape=(
            jax.ShapeDtypeStruct((num_shards, 8, 1), jnp.float32),
            jax.ShapeDtypeStruct((num_shards, 8, V), jnp.float32),
            jax.ShapeDtypeStruct((num_shards, 8, V), jnp.float32),
        ),
        grid_spec=pltpu.PrefetchScalarGridSpec(
            num_scalar_prefetch=0,
            grid=(num_shards, tiles_per_shard),
            in_specs=[
                pl.BlockSpec((block_tokens, V),
                             lambda s, t: (s * tiles_per_shard + t, 0)),
                pl.BlockSpec((block_tokens, 1),
                             lambda s, t: (s * tiles_per_shard + t, 0)),
            ],
            out_specs=(
                pl.BlockSpec((1, 8, 1), lambda s, t: (s, 0, 0)),
                pl.BlockSpec((1, 8, V), lambda s, t: (s, 0, 0)),
                pl.BlockSpec((1, 8, V), lambda s, t: (s, 0, 0)),
            ),
        ),
        compiler_params=pltpu.CompilerParams(
            dimension_semantics=("parallel", "arbitrary"),
            vmem_limit_bytes=vmem_limit,
        ),
    )(logits2d, targets2d)

    # One-shot epilogue kernel: small losses + cross-shard combine.
    def _full_spec(shape):
        nd = len(shape)
        return pl.BlockSpec(shape, lambda i, _nd=nd: (0,) * _nd)

    epilogue_kernel = _make_epilogue_kernel(n_tokens, n_pad, V)
    small_inputs = (noise_prediction, noise_target,
                    geometric_predictions, geometric_targets,
                    props_logits, props_targets,
                    visual_features, structural_features)

    out = pl.pallas_call(
        epilogue_kernel,
        out_shape=jax.ShapeDtypeStruct((1, 1), jnp.float32),
        grid_spec=pltpu.PrefetchScalarGridSpec(
            num_scalar_prefetch=0,
            grid=(1,),
            in_specs=[_full_spec(lse_p.shape),
                      _full_spec(wsum_p.shape),
                      _full_spec(prob_p.shape)]
                     + [_full_spec(a.shape) for a in small_inputs],
            out_specs=pl.BlockSpec((1, 1), lambda i: (0, 0),
                                   memory_space=pltpu.MemorySpace.SMEM),
        ),
        compiler_params=pltpu.CompilerParams(
            dimension_semantics=("arbitrary",),
            vmem_limit_bytes=vmem_limit,
        ),
    )(lse_p, wsum_p, prob_p, *small_inputs)
    return out[0, 0]


def _reference_loss(element_logits, element_targets,
                    noise_prediction, noise_target,
                    geometric_predictions, geometric_targets,
                    props_logits, props_targets,
                    visual_features, structural_features):
    """Pure-JAX mirror of MultiTaskLossFunction.forward (default config)."""
    B, S, V = element_logits.shape
    logits = element_logits.astype(jnp.float32).reshape(-1, V)
    tgt = element_targets.reshape(-1)
    logp = jax.nn.log_softmax(logits, axis=-1)
    onehot = jax.nn.one_hot(tgt, V, dtype=jnp.float32)
    eps = LABEL_SMOOTHING
    tok = -((1.0 - eps) * jnp.sum(onehot * logp, -1) + eps * jnp.mean(logp, -1))
    element_loss = jnp.mean(tok)

    diffusion = jnp.mean((noise_prediction.astype(jnp.float32)
                          - noise_target.astype(jnp.float32)) ** 2)
    geometric = jnp.mean((geometric_predictions.astype(jnp.float32)
                          - geometric_targets.astype(jnp.float32)) ** 2)

    x = props_logits.astype(jnp.float32)
    y = props_targets.astype(jnp.float32)
    props = jnp.mean(jnp.maximum(x, 0.0) - x * y + jnp.log1p(jnp.exp(-jnp.abs(x))))

    vp = jnp.mean(visual_features.astype(jnp.float32), axis=1)
    sp = jnp.mean(structural_features.astype(jnp.float32), axis=1)
    vn = vp / jnp.maximum(jnp.linalg.norm(vp, axis=-1, keepdims=True), 1e-12)
    sn = sp / jnp.maximum(jnp.linalg.norm(sp, axis=-1, keepdims=True), 1e-12)
    alignment = -jnp.mean(jnp.sum(vn * sn, axis=-1))

    probs = jax.nn.softmax(logits, axis=-1)
    batch_dist = jnp.mean(probs, axis=0)
    entropy = -jnp.sum(batch_dist * jnp.log(batch_dist + 1e-8))
    diversity = jnp.log(jnp.float32(V)) - entropy

    return (W_DIFFUSION * diffusion + W_ELEMENT * element_loss
            + W_GEOMETRIC * geometric + W_PROPS * props
            + W_ALIGNMENT * alignment + W_DIVERSITY * diversity)


if __name__ == "__main__":
    B, S, V = 2, 25, 32      # batch, seq_len, element_vocab_size
    D = 32                   # d_model
    P, T = 16, 8             # visual patches, structural tokens
    NPROPS = 16

    key = jax.random.PRNGKey(0)
    ks = jax.random.split(key, 10)
    element_logits = jax.random.normal(ks[0], (B, S, V), dtype=jnp.float32)
    element_targets = jax.random.randint(ks[1], (B, S), 0, V, dtype=jnp.int32)
    noise_prediction = jax.random.normal(ks[2], (B, S, D), dtype=jnp.float32)
    noise_target = jax.random.normal(ks[3], (B, S, D), dtype=jnp.float32)
    geometric_predictions = jax.random.normal(ks[4], (B, S, 4), dtype=jnp.float32)
    geometric_targets = jax.random.normal(ks[5], (B, S, 4), dtype=jnp.float32)
    props_logits = jax.random.normal(ks[6], (B, NPROPS), dtype=jnp.float32)
    props_targets = jax.random.bernoulli(ks[7], 0.5, (B, NPROPS)).astype(jnp.float32)
    visual_features = jax.random.normal(ks[8], (B, P, D), dtype=jnp.float32)
    structural_features = jax.random.normal(ks[9], (B, T, D), dtype=jnp.float32)

    args = (element_logits, element_targets, noise_prediction, noise_target,
            geometric_predictions, geometric_targets, props_logits,
            props_targets, visual_features, structural_features)

    ref = _reference_loss(*args)

    # Explicit small tile -> exercises the 2-shard "parallel" axis, multi-tile
    # accumulation and the pad-correction path (50 real tokens -> 64 padded).
    loss_small_tiles = jax.block_until_ready(
        multitask_loss(*args, block_tokens=8))
    # Auto-planned (generation-aware) tiling.
    loss_auto = jax.block_until_ready(multitask_loss(*args))

    for loss in (loss_small_tiles, loss_auto):
        assert jnp.isfinite(loss), "loss is not finite"
        assert jnp.allclose(loss, ref, rtol=2e-3, atol=2e-4), (loss, ref)

    print("KERNEL_OK")
</pallas_src>

<mosaic_0001>
module attributes {stable_mosaic.version = 11 : i64} {
  func.func @kernel(%arg0: i32, %arg1: i32, %arg2: memref<8x32xf32, #tpu.memory_space<vmem>>, %arg3: memref<8x1xi32, #tpu.memory_space<vmem>>, %arg4: memref<1x8x1xf32, #tpu.memory_space<vmem>>, %arg5: memref<1x8x32xf32, #tpu.memory_space<vmem>>, %arg6: memref<1x8x32xf32, #tpu.memory_space<vmem>>) attributes {dimension_semantics = [#tpu.dimension_semantics<parallel>, #tpu.dimension_semantics<arbitrary>], iteration_bounds = array<i64: 2, 4>, scalar_prefetch = 0 : i64, scratch_operands = 0 : i64, tpu.core_type = #tpu.core_type<tc>, window_params = [{transform_indices = @transform_0, window_bounds = array<i64: 8, 32>}, {transform_indices = @transform_1, window_bounds = array<i64: 8, 1>}, {transform_indices = @transform_2, window_bounds = array<i64: 1, 8, 1>}, {transform_indices = @transform_3, window_bounds = array<i64: 1, 8, 32>}, {transform_indices = @transform_4, window_bounds = array<i64: 1, 8, 32>}]} {
    %c0_i32 = arith.constant 0 : i32
    %0 = arith.cmpi eq, %arg1, %c0_i32 : i32
    %1 = arith.extui %0 : i1 to i32
    %c0_i32_0 = arith.constant 0 : i32
    %2 = arith.cmpi ne, %1, %c0_i32_0 : i32
    scf.if %2 {
      %cst_29 = arith.constant 0.000000e+00 : f32
      %43 = vector.broadcast %cst_29 : f32 to vector<1x8x1xf32>
      %c0_30 = arith.constant 0 : index
      %c0_31 = arith.constant 0 : index
      %c0_32 = arith.constant 0 : index
      %44 = vector.load %arg4[%c0_30, %c0_31, %c0_32] : memref<1x8x1xf32, #tpu.memory_space<vmem>>, vector<1x8x1xf32>
      tpu.vector_store %arg4[%c0_30, %c0_31, %c0_32], %43 {strides = array<i32>} : memref<1x8x1xf32, #tpu.memory_space<vmem>>, vector<1x8x1xf32>,
      %cst_33 = arith.constant 0.000000e+00 : f32
      %45 = vector.broadcast %cst_33 : f32 to vector<1x8x32xf32>
      %c0_34 = arith.constant 0 : index
      %c0_35 = arith.constant 0 : index
      %c0_36 = arith.constant 0 : index
      %46 = vector.load %arg5[%c0_34, %c0_35, %c0_36] : memref<1x8x32xf32, #tpu.memory_space<vmem>>, vector<1x8x32xf32>
      tpu.vector_store %arg5[%c0_34, %c0_35, %c0_36], %45 {strides = array<i32>} : memref<1x8x32xf32, #tpu.memory_space<vmem>>, vector<1x8x32xf32>,
      %cst_37 = arith.constant 0.000000e+00 : f32
      %47 = vector.broadcast %cst_37 : f32 to vector<1x8x32xf32>
      %c0_38 = arith.constant 0 : index
      %c0_39 = arith.constant 0 : index
      %c0_40 = arith.constant 0 : index
      %48 = vector.load %arg6[%c0_38, %c0_39, %c0_40] : memref<1x8x32xf32, #tpu.memory_space<vmem>>, vector<1x8x32xf32>
      tpu.vector_store %arg6[%c0_38, %c0_39, %c0_40], %47 {strides = array<i32>} : memref<1x8x32xf32, #tpu.memory_space<vmem>>, vector<1x8x32xf32>,
    } else {
    }
    %c0 = arith.constant 0 : index
    %c0_1 = arith.constant 0 : index
    %3 = vector.load %arg2[%c0, %c0_1] : memref<8x32xf32, #tpu.memory_space<vmem>>, vector<8x32xf32>
    %c0_2 = arith.constant 0 : index
    %c0_3 = arith.constant 0 : index
    %4 = vector.load %arg3[%c0_2, %c0_3] : memref<8x1xi32, #tpu.memory_space<vmem>>, vector<8x1xi32>
    %cst = arith.constant dense<0xFF800000> : vector<8xf32>
    %5 = vector.multi_reduction <maximumf>, %3, %cst [1] : vector<8x32xf32> to vector<8xf32>
    %6 = vector.shape_cast %5 : vector<8xf32> to vector<8x1xf32>
    %7 = vector.broadcast %6 : vector<8x1xf32> to vector<8x32xf32>
    %8 = arith.subf %3, %7 : vector<8x32xf32>
    %9 = math.exp %8 : vector<8x32xf32>
    %cst_4 = arith.constant dense<0.000000e+00> : vector<8xf32>
    %10 = vector.multi_reduction <add>, %9, %cst_4 [1] : vector<8x32xf32> to vector<8xf32>
    %11 = vector.shape_cast %10 : vector<8xf32> to vector<8x1xf32>
    %12 = math.log %11 : vector<8x1xf32>
    %cst_5 = arith.constant 1.000000e+00 : f32
    %13 = vector.broadcast %cst_5 : f32 to vector<8x1xf32>
    %14 = arith.divf %13, %11 : vector<8x1xf32>
    %15 = vector.broadcast %14 : vector<8x1xf32> to vector<8x32xf32>
    %16 = arith.mulf %9, %15 : vector<8x32xf32>
    %17 = tpu.iota {dimensions = array<i32: 1>} : vector<1x32xi32>
    %18 = vector.broadcast %17 : vector<1x32xi32> to vector<8x32xi32>
    %19 = vector.broadcast %4 : vector<8x1xi32> to vector<8x32xi32>
    %20 = arith.cmpi eq, %18, %19 : vector<8x32xi32>
    %cst_6 = arith.constant 0.903124988 : f32
    %cst_7 = arith.constant 3.125000e-03 : f32
    %21 = vector.broadcast %cst_6 : f32 to vector<8x32xf32>
    %22 = vector.broadcast %cst_7 : f32 to vector<8x32xf32>
    %23 = arith.select %20, %21, %22 : vector<8x32xi1>, vector<8x32xf32>
    %24 = arith.mulf %23, %8 : vector<8x32xf32>
    %c0_8 = arith.constant 0 : index
    %c0_9 = arith.constant 0 : index
    %c0_10 = arith.constant 0 : index
    %25 = vector.load %arg4[%c0_8, %c0_9, %c0_10] : memref<1x8x1xf32, #tpu.memory_space<vmem>>, vector<1x8x1xf32>
    %26 = vector.shape_cast %12 : vector<8x1xf32> to vector<1x8x1xf32>
    %cst_11 = arith.constant dense<0.000000e+00> : vector<8x1xf32>
    %27 = vector.multi_reduction <add>, %26, %cst_11 [0] : vector<1x8x1xf32> to vector<8x1xf32>
    %28 = vector.shape_cast %27 : vector<8x1xf32> to vector<1x8x1xf32>
    %29 = arith.addf %25, %28 : vector<1x8x1xf32>
    %c0_12 = arith.constant 0 : index
    %c0_13 = arith.constant 0 : index
    %c0_14 = arith.constant 0 : index
    %30 = vector.load %arg4[%c0_12, %c0_13, %c0_14] : memref<1x8x1xf32, #tpu.memory_space<vmem>>, vector<1x8x1xf32>
    tpu.vector_store %arg4[%c0_12, %c0_13, %c0_14], %29 {strides = array<i32>} : memref<1x8x1xf32, #tpu.memory_space<vmem>>, vector<1x8x1xf32>,
    %c0_15 = arith.constant 0 : index
    %c0_16 = arith.constant 0 : index
    %c0_17 = arith.constant 0 : index
    %31 = vector.load %arg5[%c0_15, %c0_16, %c0_17] : memref<1x8x32xf32, #tpu.memory_space<vmem>>, vector<1x8x32xf32>
    %32 = vector.shape_cast %24 : vector<8x32xf32> to vector<1x8x32xf32>
    %cst_18 = arith.constant dense<0.000000e+00> : vector<8x32xf32>
    %33 = vector.multi_reduction <add>, %32, %cst_18 [0] : vector<1x8x32xf32> to vector<8x32xf32>
    %34 = vector.shape_cast %33 : vector<8x32xf32> to vector<1x8x32xf32>
    %35 = arith.addf %31, %34 : vector<1x8x32xf32>
    %c0_19 = arith.constant 0 : index
    %c0_20 = arith.constant 0 : index
    %c0_21 = arith.constant 0 : index
    %36 = vector.load %arg5[%c0_19, %c0_20, %c0_21] : memref<1x8x32xf32, #tpu.memory_space<vmem>>, vector<1x8x32xf32>
    tpu.vector_store %arg5[%c0_19, %c0_20, %c0_21], %35 {strides = array<i32>} : memref<1x8x32xf32, #tpu.memory_space<vmem>>, vector<1x8x32xf32>,
    %c0_22 = arith.constant 0 : index
    %c0_23 = arith.constant 0 : index
    %c0_24 = arith.constant 0 : index
    %37 = vector.load %arg6[%c0_22, %c0_23, %c0_24] : memref<1x8x32xf32, #tpu.memory_space<vmem>>, vector<1x8x32xf32>
    %38 = vector.shape_cast %16 : vector<8x32xf32> to vector<1x8x32xf32>
    %cst_25 = arith.constant dense<0.000000e+00> : vector<8x32xf32>
    %39 = vector.multi_reduction <add>, %38, %cst_25 [0] : vector<1x8x32xf32> to vector<8x32xf32>
    %40 = vector.shape_cast %39 : vector<8x32xf32> to vector<1x8x32xf32>
    %41 = arith.addf %37, %40 : vector<1x8x32xf32>
    %c0_26 = arith.constant 0 : index
    %c0_27 = arith.constant 0 : index
    %c0_28 = arith.constant 0 : index
    %42 = vector.load %arg6[%c0_26, %c0_27, %c0_28] : memref<1x8x32xf32, #tpu.memory_space<vmem>>, vector<1x8x32xf32>
    tpu.vector_store %arg6[%c0_26, %c0_27, %c0_28], %41 {strides = array<i32>} : memref<1x8x32xf32, #tpu.memory_space<vmem>>, vector<1x8x32xf32>,
    return
  }
  func.func @transform_0(%arg0: i32, %arg1: i32) -> (i32, i32) {
    %c4_i32 = arith.constant 4 : i32
    %0 = arith.muli %arg0, %c4_i32 : i32
    %1 = arith.addi %0, %arg1 : i32
    %c0_i32 = arith.constant 0 : i32
    %c0_i32_0 = arith.constant 0 : i32
    return %1, %c0_i32 : i32, i32
  }
  func.func @transform_1(%arg0: i32, %arg1: i32) -> (i32, i32) {
    %c4_i32 = arith.constant 4 : i32
    %0 = arith.muli %arg0, %c4_i32 : i32
    %1 = arith.addi %0, %arg1 : i32
    %c0_i32 = arith.constant 0 : i32
    %c0_i32_0 = arith.constant 0 : i32
    return %1, %c0_i32 : i32, i32
  }
  func.func @transform_2(%arg0: i32, %arg1: i32) -> (i32, i32, i32) {
    %c0_i32 = arith.constant 0 : i32
    %c0_i32_0 = arith.constant 0 : i32
    %c0_i32_1 = arith.constant 0 : i32
    return %arg0, %c0_i32, %c0_i32_0 : i32, i32, i32
  }
  func.func @transform_3(%arg0: i32, %arg1: i32) -> (i32, i32, i32) {
    %c0_i32 = arith.constant 0 : i32
    %c0_i32_0 = arith.constant 0 : i32
    %c0_i32_1 = arith.constant 0 : i32
    return %arg0, %c0_i32, %c0_i32_0 : i32, i32, i32
  }
  func.func @transform_4(%arg0: i32, %arg1: i32) -> (i32, i32, i32) {
    %c0_i32 = arith.constant 0 : i32
    %c0_i32_0 = arith.constant 0 : i32
    %c0_i32_1 = arith.constant 0 : i32
    return %arg0, %c0_i32, %c0_i32_0 : i32, i32, i32
  }
}

</mosaic_0001>

<llo_original>
// kernel: tpu_custom_call.1
$region0: #{tpu_custom_call.1}
  #allocation0 [shape = 'u32[]', space=smem, size = 0x4, offset = 0x4, fixed_abs, tag = 'smem constant byte address 0x4 - core index']
  #allocation1 [shape = 'u32[144,128]{1,0:T(1,128)}', space=vmem, size = 0x12000, scoped, tag = 'internal scratch']
  %s0 = inlined_call_operand.vmem [shape: f32[64,32], index: 0, kind: input, shape index: {}]
  %s1 = inlined_call_operand.vmem [shape: s32[64,1], index: 1, kind: input, shape index: {}]
  %s2 = inlined_call_operand.vmem [shape: f32[2,8,1], index: 2, kind: output, shape index: {0}]
  %s3 = inlined_call_operand.hbm [shape: f32[2,8,32], index: 3, kind: output, shape index: {1}]
  %s4 = inlined_call_operand.hbm [shape: f32[2,8,32], index: 4, kind: output, shape index: {2}]
  %5 = xla_tuple %s2, %s3, %s4
  %s6 = sld [smem:[#allocation0]]
  $region61: #{tpu_custom_call.1} parent=0
    _
  %s8 = ssub.s32 1, %s6
  %s9 = scalar_select 0, %s8, %s6
  $region1: #{tpu_custom_call.1} parent=0
    #allocation2 [shape = 'u8[8192]{0}', space=vmem, size = 0x2000, scoped, tag = 'output window, operand 1']
    #allocation3 [shape = 's32[2]{0}', space=sflag, size = 0x8, scoped, tag = 'scoped memory for tpu_custom_call.1']
    #allocation4 [shape = 'u8[8192]{0}', space=vmem, size = 0x2000, scoped, tag = 'output window, operand 2']
    #allocation5 [shape = 's32[2]{0}', space=sflag, size = 0x8, scoped, tag = 'scoped memory for tpu_custom_call.1']
    %10 = vsyncpa [#allocation3], 0
    %s11 = scalar_lea.sflag [#allocation3], 1
    %12 = vsyncpa %s11, 0
    %13 = vsyncpa [#allocation5], 0
    %s14 = scalar_lea.sflag [#allocation5], 1
    %15 = vsyncpa %s14, 0
    loop: start=0, step=1, limit=10
    $region2: #{tpu_custom_call.1} parent=1 // loop_pre_header
      _
    $region3: #{tpu_custom_call.1} parent=1 // loop_header
      %s17 = sphi 0, %s21
      %p18 = scmp.ge.s32.totalorder %s17, 10
      %s24 = sphi 0, %s36
      %s25 = sphi 0, %s32
      %s26 = sphi 0, %s24
      %s27 = sphi 0, %s25
      %s28 = sphi 0, %s26
      %s29 = sphi 0, %s27
      %s43 = sphi 0, %s45
      %s46 = sphi 0, %s43
      %s47 = sphi 0, %s46
      %s63 = sphi 0, %s47
      %s73 = sphi 0, %s75
      %s76 = sphi 0, %s73
      %s77 = sphi 0, %s76
      %s93 = sphi 0, %s77
      %s99 = sphi 0, %s101
      %s102 = sphi 0, %s99
      %s103 = sphi 0, %s102
      %s119 = sphi 0, %s103
      %s125 = sphi 0, %s127
      %s128 = sphi 0, %s125
      %s129 = sphi 0, %s128
      %s145 = sphi 0, %s129
      %s151 = sphi 0, %s153
      %s154 = sphi 0, %s151
      %s155 = sphi 0, %s154
      %s171 = sphi 0, %s155
    $region4: #{tpu_custom_call.1} parent=1 // loop_header_branch
      %20 = sbr.rel (%p18) target = $region8
    $region5: #{tpu_custom_call.1} parent=1 // loop_body
      %s22 = ssub.s32 %s17, 1
      %s23 = ssub.s32 %s17, 2
      %s30 = sadd.s32 1, %s25
      %p31 = scmp.ge.s32.totalorder %s30, 4
      %s32 = scalar_select %p31, 0, %s30
      %s33 = sadd.s32 1, %s24
      %s34 = scalar_select %p31, %s33, %s24
      %p35 = scmp.ge.s32.totalorder %s34, 2
      %s36 = scalar_select %p35, 0, %s34
      %s37 = smul.u32 %s24, 4
      %s38 = sadd.s32 %s37, %s25
      %s39 = smul.u32 %s36, 4
      %s40 = sadd.s32 %s39, %s32
      %s41 = ssub.s32 %s38, %s40
      %p42 = scmp.eq.s32.totalorder %s41, 0
      %s44 = sadd.s32 %s43, 1
      %s45 = scalar_select %p42, %s43, %s44
      %p48 = pneg %p42
      %p49 = scmp.eq.s32.totalorder %s17, 7
      %p50 = por %p48, %p49
      %p51 = scmp.ne.s32.totalorder %s43, %s46
      %p52 = scmp.eq.s32.totalorder %s17, 0
      %p53 = por %p51, %p52
      %p54 = scmp.ne.s32.totalorder %s43, %s46
      %p55 = scmp.eq.s32.totalorder %s22, 7
      %p56 = por %p54, %p55
      %p57 = scmp.ne.s32.totalorder %s46, %s47
      %p58 = scmp.eq.s32.totalorder %s22, 0
      %p59 = por %p57, %p58
      %p60 = scmp.ne.s32.totalorder %s46, %s47
      %p61 = scmp.eq.s32.totalorder %s23, 7
      %p62 = por %p60, %p61
      %p64 = scmp.ne.s32.totalorder %s47, %s63
      %p65 = scmp.eq.s32.totalorder %s23, 0
      %p66 = por %p64, %p65
      %s67 = smul.u32 %s24, 4
      %s68 = sadd.s32 %s67, %s25
      %s69 = smul.u32 %s36, 4
      %s70 = sadd.s32 %s69, %s32
      %s71 = ssub.s32 %s68, %s70
      %p72 = scmp.eq.s32.totalorder %s71, 0
      %s74 = sadd.s32 %s73, 1
      %s75 = scalar_select %p72, %s73, %s74
      %p78 = pneg %p72
      %p79 = scmp.eq.s32.totalorder %s17, 7
      %p80 = por %p78, %p79
      %p81 = scmp.ne.s32.totalorder %s73, %s76
      %p82 = scmp.eq.s32.totalorder %s17, 0
      %p83 = por %p81, %p82
      %p84 = scmp.ne.s32.totalorder %s73, %s76
      %p85 = scmp.eq.s32.totalorder %s22, 7
      %p86 = por %p84, %p85
      %p87 = scmp.ne.s32.totalorder %s76, %s77
      %p88 = scmp.eq.s32.totalorder %s22, 0
      %p89 = por %p87, %p88
      %p90 = scmp.ne.s32.totalorder %s76, %s77
      %p91 = scmp.eq.s32.totalorder %s23, 7
      %p92 = por %p90, %p91
      %p94 = scmp.ne.s32.totalorder %s77, %s93
      %p95 = scmp.eq.s32.totalorder %s23, 0
      %p96 = por %p94, %p95
      %s97 = ssub.s32 %s24, %s36
      %p98 = scmp.eq.s32.totalorder %s97, 0
      %s100 = sadd.s32 %s99, 1
      %s101 = scalar_select %p98, %s99, %s100
      %p104 = pneg %p98
      %p105 = scmp.eq.s32.totalorder %s17, 7
      %p106 = por %p104, %p105
      %p107 = scmp.ne.s32.totalorder %s99, %s102
      %p108 = scmp.eq.s32.totalorder %s17, 0
      %p109 = por %p107, %p108
      %p110 = scmp.ne.s32.totalorder %s99, %s102
      %p111 = scmp.eq.s32.totalorder %s22, 7
      %p112 = por %p110, %p111
      %p113 = scmp.ne.s32.totalorder %s102, %s103
      %p114 = scmp.eq.s32.totalorder %s22, 0
      %p115 = por %p113, %p114
      %p116 = scmp.ne.s32.totalorder %s102, %s103
      %p117 = scmp.eq.s32.totalorder %s23, 7
      %p118 = por %p116, %p117
      %p120 = scmp.ne.s32.totalorder %s103, %s119
      %p121 = scmp.eq.s32.totalorder %s23, 0
      %p122 = por %p120, %p121
      %s123 = ssub.s32 %s24, %s36
      %p124 = scmp.eq.s32.totalorder %s123, 0
      %s126 = sadd.s32 %s125, 1
      %s127 = scalar_select %p124, %s125, %s126
      %p130 = pneg %p124
      %p131 = scmp.eq.s32.totalorder %s17, 7
      %p132 = por %p130, %p131
      %p133 = scmp.ne.s32.totalorder %s125, %s128
      %p134 = scmp.eq.s32.totalorder %s17, 0
      %p135 = por %p133, %p134
      %p136 = scmp.ne.s32.totalorder %s125, %s128
      %p137 = scmp.eq.s32.totalorder %s22, 7
      %p138 = por %p136, %p137
      %p139 = scmp.ne.s32.totalorder %s128, %s129
      %p140 = scmp.eq.s32.totalorder %s22, 0
      %p141 = por %p139, %p140
      %p142 = scmp.ne.s32.totalorder %s128, %s129
      %p143 = scmp.eq.s32.totalorder %s23, 7
      %p144 = por %p142, %p143
      %p146 = scmp.ne.s32.totalorder %s129, %s145
      %p147 = scmp.eq.s32.totalorder %s23, 0
      %p148 = por %p146, %p147
      %s149 = ssub.s32 %s24, %s36
      %p150 = scmp.eq.s32.totalorder %s149, 0
      %s152 = sadd.s32 %s151, 1
      %s153 = scalar_select %p150, %s151, %s152
      %p156 = pneg %p150
      %p157 = scmp.eq.s32.totalorder %s17, 7
      %p158 = por %p156, %p157
      %p159 = scmp.ne.s32.totalorder %s151, %s154
      %p160 = scmp.eq.s32.totalorder %s17, 0
      %p161 = por %p159, %p160
      %p162 = scmp.ne.s32.totalorder %s151, %s154
      %p163 = scmp.eq.s32.totalorder %s22, 7
      %p164 = por %p162, %p163
      %p165 = scmp.ne.s32.totalorder %s154, %s155
      %p166 = scmp.eq.s32.totalorder %s22, 0
      %p167 = por %p165, %p166
      %p168 = scmp.ne.s32.totalorder %s154, %s155
      %p169 = scmp.eq.s32.totalorder %s23, 7
      %p170 = por %p168, %p169
      %p172 = scmp.ne.s32.totalorder %s155, %s171
      %p173 = scmp.eq.s32.totalorder %s23, 0
      %p174 = por %p172, %p173
      %p175 = scmp.le.s32.totalorder 1, %s17
      %p176 = scmp.lt.s32.totalorder %s17, 9
      %p177 = pnand %p175, %p176
      %p178 = pneg %p177
      // Predicated region
      $region9: #{tpu_custom_call.1} parent=5 // pred_check
        _
      $region10: #{tpu_custom_call.1} parent=5 // pred_check_branch
        %180 = sbr.rel (%p177) target = $region12
      $region11: #{tpu_custom_call.1} parent=5 // pred_region
        %s181 = ssub.s32 %s17, 1
      $region12: #{tpu_custom_call.1} parent=5 // pred_fallthru
        _
      %p182 = scmp.lt.s32.totalorder %s17, 8
      // Predicated region
      $region13: #{tpu_custom_call.1} parent=5 // pred_check
        %p183 = pneg %p182
      $region14: #{tpu_custom_call.1} parent=5 // pred_check_branch
        %185 = sbr.rel (%p183) target = $region16
      $region15: #{tpu_custom_call.1} parent=5 // pred_region
        // Predicated region
        $region17: #{tpu_custom_call.1} parent=15 // pred_check
          %p186 = pneg %p53
        $region18: #{tpu_custom_call.1} parent=15 // pred_check_branch
          %188 = sbr.rel (%p186) target = $region20
        $region19: #{tpu_custom_call.1} parent=15 // pred_region
          %s189 = smul.u32 %s24, 4
          %s190 = sadd.s32 %s189, %s25
          %p191 = scmp.lt.s32.totalorder %s190, 7
          %s192 = scalar_select %p191, %s190, 7
          %s193 = smul.addr %s192, 8
          %s194 = scalar_lea.vmem %s0, %s193
          %s195 = smul.u32 %s24, 4
          %s196 = sadd.s32 %s195, %s25
        $region20: #{tpu_custom_call.1} parent=15 // pred_fallthru
          _
        // Predicated region
        $region21: #{tpu_custom_call.1} parent=15 // pred_check
          %p197 = pneg %p83
        $region22: #{tpu_custom_call.1} parent=15 // pred_check_branch
          %199 = sbr.rel (%p197) target = $region24
        $region23: #{tpu_custom_call.1} parent=15 // pred_region
          %s200 = smul.u32 %s24, 4
          %s201 = sadd.s32 %s200, %s25
          %p202 = scmp.lt.s32.totalorder %s201, 7
          %s203 = scalar_select %p202, %s201, 7
          %s204 = smul.addr %s203, 8
          %s205 = scalar_lea.vmem %s1, %s204
          %s206 = smul.u32 %s24, 4
          %s207 = sadd.s32 %s206, %s25
        $region24: #{tpu_custom_call.1} parent=15 // pred_fallthru
          _
      $region16: #{tpu_custom_call.1} parent=5 // pred_fallthru
        _
      %p208 = scmp.le.s32.totalorder 1, %s17
      %p209 = scmp.lt.s32.totalorder %s17, 9
      %p210 = pnand %p208, %p209
      %p211 = pneg %p210
      // Predicated region
      $region25: #{tpu_custom_call.1} parent=5 // pred_check
        _
      $region26: #{tpu_custom_call.1} parent=5 // pred_check_branch
        %213 = sbr.rel (%p210) target = $region28
      $region27: #{tpu_custom_call.1} parent=5 // pred_region
        %s214 = ssub.s32 %s17, 1
        %s215 = smul.u32 %s26, 4
        %s216 = sadd.s32 %s215, %s27
        %p217 = scmp.lt.s32.totalorder %s216, 7
        %s218 = scalar_select %p217, %s216, 7
        %s219 = smul.addr %s218, 8
        %s220 = scalar_lea.vmem %s0, %s219
        %p221 = pneg %p59
        %p222 = pneg %p56
        %s223 = smul.u32 %s26, 4
        %s224 = sadd.s32 %s223, %s27
        %p225 = scmp.lt.s32.totalorder %s224, 7
        %s226 = scalar_select %p225, %s224, 7
        %s227 = smul.addr %s226, 8
        %s228 = scalar_lea.vmem %s1, %s227
        %p229 = pneg %p89
        %p230 = pneg %p86
        %p231 = pneg %p115
        %p232 = pneg %p112
        %p233 = scmp.lt.s32.totalorder %s26, 1
        %s234 = scalar_select %p233, %s26, 1
        %s235 = smul.addr %s234, 8
        %s236 = scalar_lea.vmem %s2, %s235
        %p237 = pneg %p141
        %p238 = pneg %p138
        %s239 = sand.u32 %s128, 1
        %s240 = scalar_lea.sflag [#allocation3], %s239
        %s241 = sand.u32 %s128, 1
        %s242 = smul.addr %s241, 8
        %s243 = scalar_lea.vmem [#allocation2], %s242
        %p244 = pneg %p167
        %p245 = pneg %p164
        %s246 = sand.u32 %s154, 1
        %s247 = scalar_lea.sflag [#allocation5], %s246
        %s248 = sand.u32 %s154, 1
        %s249 = smul.addr %s248, 8
        %s250 = scalar_lea.vmem [#allocation4], %s249
        %s251 = smul.u32 %s26, 4
        %s252 = sadd.s32 %s251, %s27
        %p253 = scmp.lt.s32.totalorder %s252, 7
        %s254 = scalar_select %p253, %s252, 7
        %s255 = smul.addr %s254, 8
        %s256 = scalar_lea.vmem %s0, %s255
        %s257 = smul.u32 %s26, 4
        %s258 = sadd.s32 %s257, %s27
        %s259 = smul.u32 %s26, 4
        %s260 = sadd.s32 %s259, %s27
        %p261 = scmp.lt.s32.totalorder %s260, 7
        %s262 = scalar_select %p261, %s260, 7
        %s263 = smul.addr %s262, 8
        %s264 = scalar_lea.vmem %s1, %s263
        %s265 = smul.u32 %s26, 4
        %s266 = sadd.s32 %s265, %s27
        %p267 = scmp.lt.s32.totalorder %s26, 1
        %s268 = scalar_select %p267, %s26, 1
        %s269 = smul.addr %s268, 8
        %s270 = scalar_lea.vmem %s2, %s269
        %p271 = scmp.eq.s32.totalorder %s27, 0
        // Predicated region
        $region29: #{tpu_custom_call.1} parent=27 // pred_check
          %p272 = pneg %p271
        $region30: #{tpu_custom_call.1} parent=27 // pred_check_branch
          %274 = sbr.rel (%p272) target = $region32
        $region31: #{tpu_custom_call.1} parent=27 // pred_region
          %vm275 = vcmask 7168
          %276 = vst.msk [vmem:[%s270] sm:$0xff] %vm275, 0.0
          %vm277 = vcmask 261120
          %278 = vst.msk [vmem:[%s243] sm:$0xff] %vm277, 0.0
          %279 = vst.msk [vmem:[%s250] sm:$0xff] %vm277, 0.0
        $region32: #{tpu_custom_call.1} parent=27 // pred_fallthru
          _
        %v280 = vld [vmem:[%s256] sm:$0xff]
        %v281 = vld [vmem:[%s264] sm:$0xff]
        %vm282 = vcmask 261120
        %v283 = vsel %vm282, %v280, -inf
        %284 = vmax.xlane.f32.xlu0 %v283
        %v285 = vpop.xlane.xlu0 %284
        %v286 = vsub.f32 %v280, %v285
        %v287 = vmul.f32 %v286, 1.442695
        %v288 = vpow.pop %v287
        %v289 = vsel %vm282, %v288, 0.0
        %290 = vadd.xlane.f32.xlu0 %v289
        %v291 = vpop.xlane.xlu0 %290
        %v292 = vlog2.pop %v291
        %v293 = vmul.f32 %v292, 0.6931472
        %v294 = vrcp.pop %v291
        %v295 = vmul.f32 1.0, %v294
        %v296 = vmul.f32 %v288, %v295
        %v297 = vlaneseq
        %v298 = vand.u32 %v297, 127
        %299 = vset.pattern.permute.xlu0 0
        %300 = vperm.xlu0 %299, %v281
        %v301 = vpop.permute.xlu0 %300
        %vm302 = vcmp.eq.s32.totalorder %v298, %v301
        %v303 = vsel %vm302, 0.903125, 0.003125
        %v304 = vmul.f32 %v303, %v286
        %v305 = vld [vmem:[%s270] sm:$0xff]
        %v306 = vadd.f32 %v293, 0.0
        %v307 = vadd.f32 %v305, %v306
        %vm308 = vcmask 7168
        %309 = vst.msk [vmem:[%s270] sm:$0xff] %vm308, %v307
        %v310 = vld [vmem:[%s243] sm:$0xff]
        %v311 = vadd.f32 %v304, 0.0
        %v312 = vadd.f32 %v310, %v311
        %313 = vst.msk [vmem:[%s243] sm:$0xff] %vm282, %v312
        %v314 = vld [vmem:[%s250] sm:$0xff]
        %v315 = vadd.f32 %v296, 0.0
        %v316 = vadd.f32 %v314, %v315
        %317 = vst.msk [vmem:[%s250] sm:$0xff] %vm282, %v316
        %p318 = scmp.lt.s32.totalorder %s26, 1
        %s319 = scalar_select %p318, %s26, 1
        %s320 = smul.addr %s319, 8
        %s321 = scalar_lea.vmem %s2, %s320
        %s322 = sand.u32 %s128, 1
        %s323 = scalar_lea.sflag [#allocation3], %s322
        %s324 = sand.u32 %s128, 1
        %s325 = smul.addr %s324, 8
        %s326 = scalar_lea.vmem [#allocation2], %s325
        %s327 = sand.u32 %s154, 1
        %s328 = scalar_lea.sflag [#allocation5], %s327
        %s329 = sand.u32 %s154, 1
        %s330 = smul.addr %s329, 8
        %s331 = scalar_lea.vmem [#allocation4], %s330
        // Predicated region
        $region33: #{tpu_custom_call.1} parent=27 // pred_check
          %p332 = pneg %p112
        $region34: #{tpu_custom_call.1} parent=27 // pred_check_branch
          %334 = sbr.rel (%p332) target = $region36
        $region35: #{tpu_custom_call.1} parent=27 // pred_region
          _
        $region36: #{tpu_custom_call.1} parent=27 // pred_fallthru
          _
        // Predicated region
        $region37: #{tpu_custom_call.1} parent=27 // pred_check
          %p335 = pneg %p138
        $region38: #{tpu_custom_call.1} parent=27 // pred_check_branch
          %337 = sbr.rel (%p335) target = $region40
        $region39: #{tpu_custom_call.1} parent=27 // pred_region
          %s339 = ssub.s32 128, 128
          %340 = vsyncadd %s323, %s339
          %s341 = smul.addr %s26, 128
          %s342 = scalar_lea.hbm %s3, %s341
          %s344 = sshll.u32 %s326, 4
          %s345 = int_to_ptr.vmem [resolvable:$true] %s344
          %347 = dma.vmem_to_hbm [thread:$0]  %s345, 128, %s342, %s323
        $region40: #{tpu_custom_call.1} parent=27 // pred_fallthru
          _
        // Predicated region
        $region41: #{tpu_custom_call.1} parent=27 // pred_check
          %p348 = pneg %p164
        $region42: #{tpu_custom_call.1} parent=27 // pred_check_branch
          %350 = sbr.rel (%p348) target = $region44
        $region43: #{tpu_custom_call.1} parent=27 // pred_region
          %s352 = ssub.s32 128, 128
          %353 = vsyncadd %s328, %s352
          %s354 = smul.addr %s26, 128
          %s355 = scalar_lea.hbm %s4, %s354
          %s357 = sshll.u32 %s331, 4
          %s358 = int_to_ptr.vmem [resolvable:$true] %s357
          %360 = dma.vmem_to_hbm [thread:$0]  %s358, 128, %s355, %s328
        $region44: #{tpu_custom_call.1} parent=27 // pred_fallthru
          _
      $region28: #{tpu_custom_call.1} parent=5 // pred_fallthru
        _
      %p361 = scmp.le.s32.totalorder 2, %s17
      // Predicated region
      $region45: #{tpu_custom_call.1} parent=5 // pred_check
        %p362 = pneg %p361
      $region46: #{tpu_custom_call.1} parent=5 // pred_check_branch
        %364 = sbr.rel (%p362) target = $region48
      $region47: #{tpu_custom_call.1} parent=5 // pred_region
        %s365 = ssub.s32 %s17, 2
        // Predicated region
        $region49: #{tpu_custom_call.1} parent=47 // pred_check
          %p366 = pneg %p118
        $region50: #{tpu_custom_call.1} parent=47 // pred_check_branch
          %368 = sbr.rel (%p366) target = $region52
        $region51: #{tpu_custom_call.1} parent=47 // pred_region
          %p369 = scmp.lt.s32.totalorder %s28, 1
          %s370 = scalar_select %p369, %s28, 1
          %s371 = smul.addr %s370, 8
          %s372 = scalar_lea.vmem %s2, %s371
        $region52: #{tpu_custom_call.1} parent=47 // pred_fallthru
          _
        // Predicated region
        $region53: #{tpu_custom_call.1} parent=47 // pred_check
          %p373 = pneg %p144
        $region54: #{tpu_custom_call.1} parent=47 // pred_check_branch
          %375 = sbr.rel (%p373) target = $region56
        $region55: #{tpu_custom_call.1} parent=47 // pred_region
          %s376 = sand.u32 %s129, 1
          %s377 = scalar_lea.sflag [#allocation3], %s376
          %s378 = sand.u32 %s129, 1
          %s379 = smul.addr %s378, 8
          %s380 = scalar_lea.vmem [#allocation2], %s379
          %381 = dma.done %s377, 128
        $region56: #{tpu_custom_call.1} parent=47 // pred_fallthru
          _
        // Predicated region
        $region57: #{tpu_custom_call.1} parent=47 // pred_check
          %p382 = pneg %p170
        $region58: #{tpu_custom_call.1} parent=47 // pred_check_branch
          %384 = sbr.rel (%p382) target = $region60
        $region59: #{tpu_custom_call.1} parent=47 // pred_region
          %s385 = sand.u32 %s155, 1
          %s386 = scalar_lea.sflag [#allocation5], %s385
          %s387 = sand.u32 %s155, 1
          %s388 = smul.addr %s387, 8
          %s389 = scalar_lea.vmem [#allocation4], %s388
          %390 = dma.done %s386, 128
        $region60: #{tpu_custom_call.1} parent=47 // pred_fallthru
          _
      $region48: #{tpu_custom_call.1} parent=5 // pred_fallthru
        _
    $region6: #{tpu_custom_call.1} parent=1 // loop_footer
      %s21 = sadd.s32 1, %s17
    $region7: #{tpu_custom_call.1} parent=1 // loop_footer_branch
      %16 = sbr.rel target = $region3
    $region8: #{tpu_custom_call.1} parent=1 // loop_exit
      _
    %391 = vsyncpa [#allocation3], 1
    %s392 = scalar_lea.sflag [#allocation3], 1
    %393 = vsyncpa %s392, 1
    %394 = vsyncpa [#allocation5], 1
    %s395 = scalar_lea.sflag [#allocation5], 1
    %396 = vsyncpa %s395, 1

</llo_original>
